<compile_context>
chip_gen: v5e
topology: v5e:2x2
jax: 0.10.0
libtpu: 0.0.40
codegen_flags: <defaults>
</compile_context>

<pallas_src>
import functools
import math

import jax
import jax.numpy as jnp
import numpy as np
from jax import lax
from jax.experimental import pallas as pl
from jax.experimental.pallas import tpu as pltpu

_EPS = 1e-5


def _ln_kernel(x_ref, w_ref, b_ref, o_ref, *, inv_c, eps):
    """Fallback path: block (TM, C); each row reduced over the lane axis (XLU)."""
    x = x_ref[...].astype(jnp.float32)
    sx = jnp.sum(x, axis=-1, keepdims=True)
    sxx = jnp.sum(x * x, axis=-1, keepdims=True)
    mu = sx * inv_c
    var = jnp.maximum(sxx * inv_c - mu * mu, 0.0)
    inv = lax.rsqrt(var + eps)
    w = w_ref[...].astype(jnp.float32)
    b = b_ref[...].astype(jnp.float32)
    o_ref[...] = ((x - mu) * inv * w + b).astype(o_ref.dtype)


def _ln_kernel_packed(x_ref, a_ref, w_ref, b_ref, o_ref, *, inv_c, eps):
    """Lane-dense path: each 128-wide row holds g = 128//C independent segments.

    a_ref is a (128, 128) block-diagonal ones matrix (CxC blocks of ones).
    x @ a yields each segment's sum broadcast back across that segment, so the
    reduction AND the broadcast both run on the MXU (a free slot here, the
    kernel is HBM-bound) while all VPU work and all VMEM loads/stores stay
    128-lane dense.
    """
    x = x_ref[...].astype(jnp.float32)                               # (TM, 128)
    a = a_ref[...]                                                   # (128, 128)
    sx = jnp.dot(x, a, preferred_element_type=jnp.float32)           # seg sums
    sxx = jnp.dot(x * x, a, preferred_element_type=jnp.float32)      # seg sumsq
    mu = sx * inv_c
    var = jnp.maximum(sxx * inv_c - mu * mu, 0.0)
    inv = lax.rsqrt(var + eps)
    w = w_ref[...].astype(jnp.float32)
    b = b_ref[...].astype(jnp.float32)
    o_ref[...] = ((x - mu) * inv * w + b).astype(o_ref.dtype)


def _pick_tm(n_rows, row_bytes, target_block_bytes, min_steps=4):
    """Row-tile size: VMEM-budget block, 8-aligned, with a min-grid-steps cap.

    The min-steps cap only kicks in when the whole tensor is large enough
    (>= 2 blocks of the VMEM target) that extra grid steps actually buy
    DMA/compute overlap and megacore sharding; tiny inputs keep one block so
    per-step overhead (~0.35 us) never dominates.
    """
    tm = max(8, (target_block_bytes // max(row_bytes, 1)) // 8 * 8)
    total_bytes = n_rows * row_bytes
    if total_bytes >= 2 * target_block_bytes:
        cap = max(8, (n_rows // min_steps) // 8 * 8)
        tm = min(tm, cap)
    if tm >= n_rows:
        return int(n_rows)   # full-dim block: always legal
    return int(tm)           # multiple of 8; ragged tail handled by cdiv grid


def _vmem_limit_bytes(tm, width, itemsize):
    io = 2 * 2 * tm * width * itemsize    # double-buffered input + output blocks
    work = 10 * tm * width * 4            # generous bound on f32 temporaries
    est = io + work + (4 << 20)           # + slack (ones matrix, weight, bias)
    return int(min(max(est, 16 << 20), 48 << 20))


def with_bias_layernorm(x, weight, bias, *, target_block_bytes=2 << 20, eps=_EPS):
    """LayerNorm over the last axis; x: (..., C), weight/bias: (C,)."""
    orig_shape = x.shape
    C = int(orig_shape[-1])
    rows = int(math.prod(orig_shape[:-1]))
    itemsize = int(jnp.dtype(x.dtype).itemsize)

    # Lane-dense packing factor (C must divide 128 and rows must split evenly).
    g = 1
    if C < 128 and 128 % C == 0 and rows % (128 // C) == 0:
        g = 128 // C

    n_rows = rows // g
    width = g * C
    x2 = x.reshape(n_rows, width)          # row-major contiguous -> free reshape

    tm = _pick_tm(n_rows, width * itemsize, target_block_bytes)
    grid = (pl.cdiv(n_rows, tm),)

    w2 = jnp.tile(weight.reshape(1, C), (1, g))
    b2 = jnp.tile(bias.reshape(1, C), (1, g))

    x_spec = pl.BlockSpec((tm, width), lambda i: (i, 0))
    wb_spec = pl.BlockSpec((1, width), lambda i: (0, 0))
    out_spec = pl.BlockSpec((tm, width), lambda i: (i, 0))

    if g > 1:
        seg = np.arange(width) // C
        a = jnp.asarray((seg[:, None] == seg[None, :]).astype(np.float32))
        kernel = functools.partial(_ln_kernel_packed, inv_c=1.0 / C, eps=eps)
        in_specs = [x_spec,
                    pl.BlockSpec((width, width), lambda i: (0, 0)),
                    wb_spec, wb_spec]
        args = (x2, a, w2, b2)
    else:
        kernel = functools.partial(_ln_kernel, inv_c=1.0 / C, eps=eps)
        in_specs = [x_spec, wb_spec, wb_spec]
        args = (x2, w2, b2)

    out = pl.pallas_call(
        kernel,
        out_shape=jax.ShapeDtypeStruct((n_rows, width), x.dtype),
        grid_spec=pltpu.PrefetchScalarGridSpec(
            num_scalar_prefetch=0,
            grid=grid,
            in_specs=in_specs,
            out_specs=out_spec,
        ),
        compiler_params=pltpu.CompilerParams(
            dimension_semantics=("parallel",),
            vmem_limit_bytes=_vmem_limit_bytes(tm, width, itemsize),
        ),
    )(*args)

    return out.reshape(orig_shape)


def _reference(x, weight, bias, eps=_EPS):
    x32 = x.astype(jnp.float32)
    mu = jnp.mean(x32, axis=-1, keepdims=True)
    var = jnp.mean((x32 - mu) ** 2, axis=-1, keepdims=True)
    y = (x32 - mu) / jnp.sqrt(var + eps) * weight.astype(jnp.float32) \
        + bias.astype(jnp.float32)
    return y.astype(x.dtype)


if __name__ == "__main__":
    key = jax.random.PRNGKey(0)
    k1, k2, k3 = jax.random.split(key, 3)

    # Main case: polyper's to_3d layout (B, H*W, C), C=32 -> packed lane-dense path.
    B, H, W, C = 2, 16, 16, 32
    x = jax.random.normal(k1, (B, H * W, C), dtype=jnp.float32)
    weight = jnp.ones((C,), dtype=jnp.float32)    # module init: ones / zeros
    bias = jnp.zeros((C,), dtype=jnp.float32)

    out = jax.block_until_ready(with_bias_layernorm(x, weight, bias))
    ref = _reference(x, weight, bias)
    assert out.shape == x.shape and out.dtype == x.dtype
    assert float(jnp.max(jnp.abs(out - ref))) < 1e-4, "mismatch (main case)"

    # Packed path with non-trivial affine params and a ragged cdiv grid.
    x2 = jax.random.normal(k2, (2, 20 * 20, C), dtype=jnp.float32)
    w2 = jax.random.normal(k3, (C,), dtype=jnp.float32)
    b2 = jax.random.normal(jax.random.PRNGKey(7), (C,), dtype=jnp.float32)
    out2 = jax.block_until_ready(
        with_bias_layernorm(x2, w2, b2, target_block_bytes=64 * 1024))
    assert float(jnp.max(jnp.abs(out2 - _reference(x2, w2, b2)))) < 1e-4, \
        "mismatch (packed ragged case)"

    # Fallback (unpacked) path: C that does not divide 128, ragged rows.
    C3 = 48
    x3 = jax.random.normal(jax.random.PRNGKey(3), (2, 13 * 13, C3), dtype=jnp.float32)
    w3 = jnp.ones((C3,), dtype=jnp.float32)
    b3 = jnp.zeros((C3,), dtype=jnp.float32)
    out3 = jax.block_until_ready(
        with_bias_layernorm(x3, w3, b3, target_block_bytes=64 * 1024))
    assert float(jnp.max(jnp.abs(out3 - _reference(x3, w3, b3)))) < 1e-4, \
        "mismatch (fallback case)"

    # Larger case that exercises the multi-step pipelined grid (>= 4 steps).
    x4 = jax.random.normal(jax.random.PRNGKey(11), (4, 64 * 64, C), dtype=jnp.float32)
    out4 = jax.block_until_ready(
        with_bias_layernorm(x4, weight, bias, target_block_bytes=256 * 1024))
    assert float(jnp.max(jnp.abs(out4 - _reference(x4, weight, bias)))) < 1e-4, \
        "mismatch (pipelined case)"

    print("KERNEL_OK")
</pallas_src>

<mosaic_0001>
module attributes {stable_mosaic.version = 11 : i64} {
  func.func @_ln_kernel_packed(%arg0: i32, %arg1: memref<128x128xf32, #tpu.memory_space<vmem>>, %arg2: memref<128x128xf32, #tpu.memory_space<vmem>>, %arg3: memref<1x128xf32, #tpu.memory_space<vmem>>, %arg4: memref<1x128xf32, #tpu.memory_space<vmem>>, %arg5: memref<128x128xf32, #tpu.memory_space<vmem>>) attributes {dimension_semantics = [#tpu.dimension_semantics<parallel>], iteration_bounds = array<i64: 1>, scalar_prefetch = 0 : i64, scratch_operands = 0 : i64, tpu.core_type = #tpu.core_type<tc>, window_params = [{transform_indices = @transform_0, window_bounds = array<i64: 128, 128>}, {pipeline_mode = #tpu.pipeline_mode<synchronous>, transform_indices = @transform_1, window_bounds = array<i64: 128, 128>}, {pipeline_mode = #tpu.pipeline_mode<synchronous>, transform_indices = @transform_2, window_bounds = array<i64: 1, 128>}, {pipeline_mode = #tpu.pipeline_mode<synchronous>, transform_indices = @transform_3, window_bounds = array<i64: 1, 128>}, {transform_indices = @transform_4, window_bounds = array<i64: 128, 128>}]} {
    %c0 = arith.constant 0 : index
    %c0_0 = arith.constant 0 : index
    %0 = vector.load %arg1[%c0, %c0_0] : memref<128x128xf32, #tpu.memory_space<vmem>>, vector<128x128xf32>
    %c0_1 = arith.constant 0 : index
    %c0_2 = arith.constant 0 : index
    %1 = vector.load %arg2[%c0_1, %c0_2] : memref<128x128xf32, #tpu.memory_space<vmem>>, vector<128x128xf32>
    %cst = arith.constant dense<0.000000e+00> : vector<128x128xf32>
    %2 = tpu.matmul %0, %1, %cst {dimension_numbers = #tpu.dot_dimension_numbers<[1], [0], [0], [1], [0, 0, 1, 1], [], []>} : vector<128x128xf32>, vector<128x128xf32>, vector<128x128xf32> -> vector<128x128xf32>
    %3 = arith.mulf %0, %0 : vector<128x128xf32>
    %cst_3 = arith.constant dense<0.000000e+00> : vector<128x128xf32>
    %4 = tpu.matmul %3, %1, %cst_3 {dimension_numbers = #tpu.dot_dimension_numbers<[1], [0], [0], [1], [0, 0, 1, 1], [], []>} : vector<128x128xf32>, vector<128x128xf32>, vector<128x128xf32> -> vector<128x128xf32>
    %cst_4 = arith.constant 3.125000e-02 : f32
    %5 = vector.broadcast %cst_4 : f32 to vector<128x128xf32>
    %6 = arith.mulf %2, %5 : vector<128x128xf32>
    %cst_5 = arith.constant 3.125000e-02 : f32
    %7 = vector.broadcast %cst_5 : f32 to vector<128x128xf32>
    %8 = arith.mulf %4, %7 : vector<128x128xf32>
    %9 = arith.mulf %6, %6 : vector<128x128xf32>
    %10 = arith.subf %8, %9 : vector<128x128xf32>
    %cst_6 = arith.constant 0.000000e+00 : f32
    %11 = vector.broadcast %cst_6 : f32 to vector<128x128xf32>
    %12 = arith.maximumf %10, %11 : vector<128x128xf32>
    %cst_7 = arith.constant 9.99999974E-6 : f32
    %13 = vector.broadcast %cst_7 : f32 to vector<128x128xf32>
    %14 = arith.addf %12, %13 : vector<128x128xf32>
    %15 = math.rsqrt %14 : vector<128x128xf32>
    %c0_8 = arith.constant 0 : index
    %c0_9 = arith.constant 0 : index
    %16 = vector.load %arg3[%c0_8, %c0_9] : memref<1x128xf32, #tpu.memory_space<vmem>>, vector<1x128xf32>
    %c0_10 = arith.constant 0 : index
    %c0_11 = arith.constant 0 : index
    %17 = vector.load %arg4[%c0_10, %c0_11] : memref<1x128xf32, #tpu.memory_space<vmem>>, vector<1x128xf32>
    %18 = arith.subf %0, %6 : vector<128x128xf32>
    %19 = arith.mulf %18, %15 : vector<128x128xf32>
    %20 = vector.broadcast %16 : vector<1x128xf32> to vector<128x128xf32>
    %21 = arith.mulf %19, %20 : vector<128x128xf32>
    %22 = vector.broadcast %17 : vector<1x128xf32> to vector<128x128xf32>
    %23 = arith.addf %21, %22 : vector<128x128xf32>
    %c0_12 = arith.constant 0 : index
    %c0_13 = arith.constant 0 : index
    %24 = vector.load %arg5[%c0_12, %c0_13] : memref<128x128xf32, #tpu.memory_space<vmem>>, vector<128x128xf32>
    tpu.vector_store %arg5[%c0_12, %c0_13], %23 {strides = array<i32>} : memref<128x128xf32, #tpu.memory_space<vmem>>, vector<128x128xf32>,
    return
  }
  func.func @transform_0(%arg0: i32) -> (i32, i32) {
    %c0_i32 = arith.constant 0 : i32
    %c0_i32_0 = arith.constant 0 : i32
    return %arg0, %c0_i32 : i32, i32
  }
  func.func @transform_1(%arg0: i32) -> (i32, i32) {
    %c0_i32 = arith.constant 0 : i32
    %c0_i32_0 = arith.constant 0 : i32
    %c0_i32_1 = arith.constant 0 : i32
    return %c0_i32, %c0_i32_0 : i32, i32
  }
  func.func @transform_2(%arg0: i32) -> (i32, i32) {
    %c0_i32 = arith.constant 0 : i32
    %c0_i32_0 = arith.constant 0 : i32
    %c0_i32_1 = arith.constant 0 : i32
    return %c0_i32, %c0_i32_0 : i32, i32
  }
  func.func @transform_3(%arg0: i32) -> (i32, i32) {
    %c0_i32 = arith.constant 0 : i32
    %c0_i32_0 = arith.constant 0 : i32
    %c0_i32_1 = arith.constant 0 : i32
    return %c0_i32, %c0_i32_0 : i32, i32
  }
  func.func @transform_4(%arg0: i32) -> (i32, i32) {
    %c0_i32 = arith.constant 0 : i32
    %c0_i32_0 = arith.constant 0 : i32
    return %arg0, %c0_i32 : i32, i32
  }
}

</mosaic_0001>

<llo_original>
// kernel: tpu_custom_call.1
$region0: #{tpu_custom_call.1}
  #allocation0 [shape = 'u32[]', space=smem, size = 0x4, offset = 0x4, fixed_abs, tag = 'smem constant byte address 0x4 - core index']
  #allocation1 [shape = 'u32[72,128]{1,0:T(1,128)}', space=vmem, size = 0x9000, scoped, tag = 'internal scratch']
  %s0 = inlined_call_operand.hbm [shape: f32[128,128], index: 0, kind: input, shape index: {}]
  %s1 = inlined_call_operand.hbm [shape: f32[128,128], index: 1, kind: input, shape index: {}]
  %s2 = inlined_call_operand.vmem [shape: f32[1,128], index: 2, kind: input, shape index: {}]
  %s3 = inlined_call_operand.vmem [shape: f32[1,128], index: 3, kind: input, shape index: {}]
  %s4 = inlined_call_operand.hbm [shape: f32[128,128], index: 4, kind: output, shape index: {}]
  %s5 = sld [smem:[#allocation0]]
  $region34: #{tpu_custom_call.1} parent=0
    _
  %s7 = ssub.s32 1, %s5
  %s8 = scalar_select 0, %s7, %s5
  $region1: #{tpu_custom_call.1} parent=0
    #allocation2 [shape = 'u8[65536]{0}', space=vmem, size = 0x10000, scoped, tag = 'input window, operand 0, single buffered']
    #allocation3 [shape = 's32[1]{0}', space=sflag, size = 0x4, scoped, tag = 'scoped memory for tpu_custom_call.1']
    #allocation4 [shape = 's32[1]{0}', space=sflag, size = 0x4, scoped, tag = 'scoped memory for tpu_custom_call.1']
    #allocation5 [shape = 'u8[65536]{0}', space=vmem, size = 0x10000, scoped, tag = 'input window, operand 1, single buffered']
    #allocation6 [shape = 's32[1]{0}', space=sflag, size = 0x4, scoped, tag = 'scoped memory for tpu_custom_call.1']
    #allocation7 [shape = 'u8[65536]{0}', space=vmem, size = 0x10000, scoped, tag = 'output window, operand 0, single buffered']
    %9 = vsyncpa [#allocation3], 0
    %10 = vsyncpa [#allocation6], 0
    %11 = vsyncpa [#allocation4], 0
    // Predicated region
    $region2: #{tpu_custom_call.1} parent=1 // pred_check
      _
    $region3: #{tpu_custom_call.1} parent=1 // pred_check_branch
      %13 = sbr.rel (0) target = $region5
    $region4: #{tpu_custom_call.1} parent=1 // pred_region
      %15 = vsyncadd [#allocation3], 0
      %s16 = sshll.u32 %s0, 4
      %s17 = int_to_ptr.hbm [resolvable:$true] %s16
      %s18 = sshll.u32 [#allocation2], 4
      %s19 = int_to_ptr.vmem [resolvable:$true] %s18
      %24 = dma.hbm_to_vmem [thread:$0]  %s17, 2048, %s19, [#allocation3], 128, 128, 8
    $region5: #{tpu_custom_call.1} parent=1 // pred_fallthru
      _
    // Predicated region
    $region6: #{tpu_custom_call.1} parent=1 // pred_check
      _
    $region7: #{tpu_custom_call.1} parent=1 // pred_check_branch
      %26 = sbr.rel (0) target = $region9
    $region8: #{tpu_custom_call.1} parent=1 // pred_region
      %28 = vsyncadd [#allocation6], 0
      %s29 = sshll.u32 %s1, 4
      %s30 = int_to_ptr.hbm [resolvable:$true] %s29
      %s31 = sshll.u32 [#allocation5], 4
      %s32 = int_to_ptr.vmem [resolvable:$true] %s31
      %37 = dma.hbm_to_vmem [thread:$0]  %s30, 2048, %s32, [#allocation6], 128, 128, 8
    $region9: #{tpu_custom_call.1} parent=1 // pred_fallthru
      _
    // Predicated region
    $region10: #{tpu_custom_call.1} parent=1 // pred_check
      _
    $region11: #{tpu_custom_call.1} parent=1 // pred_check_branch
      %39 = sbr.rel (0) target = $region13
    $region12: #{tpu_custom_call.1} parent=1 // pred_region
      _
    $region13: #{tpu_custom_call.1} parent=1 // pred_fallthru
      _
    // Predicated region
    $region14: #{tpu_custom_call.1} parent=1 // pred_check
      _
    $region15: #{tpu_custom_call.1} parent=1 // pred_check_branch
      %41 = sbr.rel (0) target = $region17
    $region16: #{tpu_custom_call.1} parent=1 // pred_region
      _
    $region17: #{tpu_custom_call.1} parent=1 // pred_fallthru
      _
    // Predicated region
    $region18: #{tpu_custom_call.1} parent=1 // pred_check
      _
    $region19: #{tpu_custom_call.1} parent=1 // pred_check_branch
      %43 = sbr.rel (0) target = $region21
    $region20: #{tpu_custom_call.1} parent=1 // pred_region
      %45 = dma.done [#allocation3], 2048
    $region21: #{tpu_custom_call.1} parent=1 // pred_fallthru
      _
    // Predicated region
    $region22: #{tpu_custom_call.1} parent=1 // pred_check
      _
    $region23: #{tpu_custom_call.1} parent=1 // pred_check_branch
      %47 = sbr.rel (0) target = $region25
    $region24: #{tpu_custom_call.1} parent=1 // pred_region
      %49 = dma.done [#allocation6], 2048
    $region25: #{tpu_custom_call.1} parent=1 // pred_fallthru
      _
    %v50 = vld [vmem:[#allocation2] sm:$0xff]
    %v51 = vld [vmem:[#allocation2 + $0x8] sm:$0xff]
    %v52 = vld [vmem:[#allocation2 + $0x10] sm:$0xff]
    %v53 = vld [vmem:[#allocation2 + $0x18] sm:$0xff]
    %v54 = vld [vmem:[#allocation2 + $0x20] sm:$0xff]
    %v55 = vld [vmem:[#allocation2 + $0x28] sm:$0xff]
    %v56 = vld [vmem:[#allocation2 + $0x30] sm:$0xff]
    %v57 = vld [vmem:[#allocation2 + $0x38] sm:$0xff]
    %v58 = vld [vmem:[#allocation2 + $0x40] sm:$0xff]
    %v59 = vld [vmem:[#allocation2 + $0x48] sm:$0xff]
    %v60 = vld [vmem:[#allocation2 + $0x50] sm:$0xff]
    %v61 = vld [vmem:[#allocation2 + $0x58] sm:$0xff]
    %v62 = vld [vmem:[#allocation2 + $0x60] sm:$0xff]
    %v63 = vld [vmem:[#allocation2 + $0x68] sm:$0xff]
    %v64 = vld [vmem:[#allocation2 + $0x70] sm:$0xff]
    %v65 = vld [vmem:[#allocation2 + $0x78] sm:$0xff]
    %v66 = vld [vmem:[#allocation5] sm:$0xff]
    %v67 = vld [vmem:[#allocation5 + $0x8] sm:$0xff]
    %v68 = vld [vmem:[#allocation5 + $0x10] sm:$0xff]
    %v69 = vld [vmem:[#allocation5 + $0x18] sm:$0xff]
    %v70 = vld [vmem:[#allocation5 + $0x20] sm:$0xff]
    %v71 = vld [vmem:[#allocation5 + $0x28] sm:$0xff]
    %v72 = vld [vmem:[#allocation5 + $0x30] sm:$0xff]
    %v73 = vld [vmem:[#allocation5 + $0x38] sm:$0xff]
    %v74 = vld [vmem:[#allocation5 + $0x40] sm:$0xff]
    %v75 = vld [vmem:[#allocation5 + $0x48] sm:$0xff]
    %v76 = vld [vmem:[#allocation5 + $0x50] sm:$0xff]
    %v77 = vld [vmem:[#allocation5 + $0x58] sm:$0xff]
    %v78 = vld [vmem:[#allocation5 + $0x60] sm:$0xff]
    %v79 = vld [vmem:[#allocation5 + $0x68] sm:$0xff]
    %v80 = vld [vmem:[#allocation5 + $0x70] sm:$0xff]
    %v81 = vld [vmem:[#allocation5 + $0x78] sm:$0xff]
    %82 = vmatpush.msra.mxu0 %v81
    %83 = vmatpush.msra.mxu0 %v80
    %84 = vmatpush.msra.mxu0 %v79
    %85 = vmatpush.msra.mxu0 %v78
    %86 = vmatpush.msra.mxu0 %v77
    %87 = vmatpush.msra.mxu0 %v76
    %88 = vmatpush.msra.mxu0 %v75
    %89 = vmatpush.msra.mxu0 %v74
    %90 = vmatpush.msra.mxu0 %v73
    %91 = vmatpush.msra.mxu0 %v72
    %92 = vmatpush.msra.mxu0 %v71
    %93 = vmatpush.msra.mxu0 %v70
    %94 = vmatpush.msra.mxu0 %v69
    %95 = vmatpush.msra.mxu0 %v68
    %96 = vmatpush.msra.mxu0 %v67
    %97 = vmatpush.msra.mxu0 %v66
    %98 = vmatmul.f32.gmra.mxu0 %v50
    %v99 = vpop.f32.mrf.mxu0
    %v100 = vadd.f32 0.0, %v99
    %101 = vmatmul.f32.gmra.mxu0 %v51
    %v102 = vpop.f32.mrf.mxu0
    %v103 = vadd.f32 0.0, %v102
    %104 = vmatmul.f32.gmra.mxu0 %v52
    %v105 = vpop.f32.mrf.mxu0
    %v106 = vadd.f32 0.0, %v105
    %107 = vmatmul.f32.gmra.mxu0 %v53
    %v108 = vpop.f32.mrf.mxu0
    %v109 = vadd.f32 0.0, %v108
    %110 = vmatmul.f32.gmra.mxu0 %v54
    %v111 = vpop.f32.mrf.mxu0
    %v112 = vadd.f32 0.0, %v111
    %113 = vmatmul.f32.gmra.mxu0 %v55
    %v114 = vpop.f32.mrf.mxu0
    %v115 = vadd.f32 0.0, %v114
    %116 = vmatmul.f32.gmra.mxu0 %v56
    %v117 = vpop.f32.mrf.mxu0
    %v118 = vadd.f32 0.0, %v117
    %119 = vmatmul.f32.gmra.mxu0 %v57
    %v120 = vpop.f32.mrf.mxu0
    %v121 = vadd.f32 0.0, %v120
    %122 = vmatmul.f32.gmra.mxu0 %v58
    %v123 = vpop.f32.mrf.mxu0
    %v124 = vadd.f32 0.0, %v123
    %125 = vmatmul.f32.gmra.mxu0 %v59
    %v126 = vpop.f32.mrf.mxu0
    %v127 = vadd.f32 0.0, %v126
    %128 = vmatmul.f32.gmra.mxu0 %v60
    %v129 = vpop.f32.mrf.mxu0
    %v130 = vadd.f32 0.0, %v129
    %131 = vmatmul.f32.gmra.mxu0 %v61
    %v132 = vpop.f32.mrf.mxu0
    %v133 = vadd.f32 0.0, %v132
    %134 = vmatmul.f32.gmra.mxu0 %v62
    %v135 = vpop.f32.mrf.mxu0
    %v136 = vadd.f32 0.0, %v135
    %137 = vmatmul.f32.gmra.mxu0 %v63
    %v138 = vpop.f32.mrf.mxu0
    %v139 = vadd.f32 0.0, %v138
    %140 = vmatmul.f32.gmra.mxu0 %v64
    %v141 = vpop.f32.mrf.mxu0
    %v142 = vadd.f32 0.0, %v141
    %143 = vmatmul.f32.gmra.mxu0 %v65
    %v144 = vpop.f32.mrf.mxu0
    %v145 = vadd.f32 0.0, %v144
    %146 = vdwg.mxu0
    %v147 = vmul.f32 %v50, %v50
    %v148 = vmul.f32 %v51, %v51
    %v149 = vmul.f32 %v52, %v52
    %v150 = vmul.f32 %v53, %v53
    %v151 = vmul.f32 %v54, %v54
    %v152 = vmul.f32 %v55, %v55
    %v153 = vmul.f32 %v56, %v56
    %v154 = vmul.f32 %v57, %v57
    %v155 = vmul.f32 %v58, %v58
    %v156 = vmul.f32 %v59, %v59
    %v157 = vmul.f32 %v60, %v60
    %v158 = vmul.f32 %v61, %v61
    %v159 = vmul.f32 %v62, %v62
    %v160 = vmul.f32 %v63, %v63
    %v161 = vmul.f32 %v64, %v64
    %v162 = vmul.f32 %v65, %v65
    %163 = vmatpush.msra.mxu0 %v81
    %164 = vmatpush.msra.mxu0 %v80
    %165 = vmatpush.msra.mxu0 %v79
    %166 = vmatpush.msra.mxu0 %v78
    %167 = vmatpush.msra.mxu0 %v77
    %168 = vmatpush.msra.mxu0 %v76
    %169 = vmatpush.msra.mxu0 %v75
    %170 = vmatpush.msra.mxu0 %v74
    %171 = vmatpush.msra.mxu0 %v73
    %172 = vmatpush.msra.mxu0 %v72
    %173 = vmatpush.msra.mxu0 %v71
    %174 = vmatpush.msra.mxu0 %v70
    %175 = vmatpush.msra.mxu0 %v69
    %176 = vmatpush.msra.mxu0 %v68
    %177 = vmatpush.msra.mxu0 %v67
    %178 = vmatpush.msra.mxu0 %v66
    %179 = vmatmul.f32.gmra.mxu0 %v147
    %v180 = vpop.f32.mrf.mxu0
    %v181 = vadd.f32 0.0, %v180
    %182 = vmatmul.f32.gmra.mxu0 %v148
    %v183 = vpop.f32.mrf.mxu0
    %v184 = vadd.f32 0.0, %v183
    %185 = vmatmul.f32.gmra.mxu0 %v149
    %v186 = vpop.f32.mrf.mxu0
    %v187 = vadd.f32 0.0, %v186
    %188 = vmatmul.f32.gmra.mxu0 %v150
    %v189 = vpop.f32.mrf.mxu0
    %v190 = vadd.f32 0.0, %v189
    %191 = vmatmul.f32.gmra.mxu0 %v151
    %v192 = vpop.f32.mrf.mxu0
    %v193 = vadd.f32 0.0, %v192
    %194 = vmatmul.f32.gmra.mxu0 %v152
    %v195 = vpop.f32.mrf.mxu0
    %v196 = vadd.f32 0.0, %v195
    %197 = vmatmul.f32.gmra.mxu0 %v153
    %v198 = vpop.f32.mrf.mxu0
    %v199 = vadd.f32 0.0, %v198
    %200 = vmatmul.f32.gmra.mxu0 %v154
    %v201 = vpop.f32.mrf.mxu0
    %v202 = vadd.f32 0.0, %v201
    %203 = vmatmul.f32.gmra.mxu0 %v155
    %v204 = vpop.f32.mrf.mxu0
    %v205 = vadd.f32 0.0, %v204
    %206 = vmatmul.f32.gmra.mxu0 %v156
    %v207 = vpop.f32.mrf.mxu0
    %v208 = vadd.f32 0.0, %v207
    %209 = vmatmul.f32.gmra.mxu0 %v157
    %v210 = vpop.f32.mrf.mxu0
    %v211 = vadd.f32 0.0, %v210
    %212 = vmatmul.f32.gmra.mxu0 %v158
    %v213 = vpop.f32.mrf.mxu0
    %v214 = vadd.f32 0.0, %v213
    %215 = vmatmul.f32.gmra.mxu0 %v159
    %v216 = vpop.f32.mrf.mxu0
    %v217 = vadd.f32 0.0, %v216
    %218 = vmatmul.f32.gmra.mxu0 %v160
    %v219 = vpop.f32.mrf.mxu0
    %v220 = vadd.f32 0.0, %v219
    %221 = vmatmul.f32.gmra.mxu0 %v161
    %v222 = vpop.f32.mrf.mxu0
    %v223 = vadd.f32 0.0, %v222
    %224 = vmatmul.f32.gmra.mxu0 %v162
    %v225 = vpop.f32.mrf.mxu0
    %v226 = vadd.f32 0.0, %v225
    %227 = vdwg.mxu0
    %v228 = vmul.f32 %v100, 0.03125
    %v229 = vmul.f32 %v103, 0.03125
    %v230 = vmul.f32 %v106, 0.03125
    %v231 = vmul.f32 %v109, 0.03125
    %v232 = vmul.f32 %v112, 0.03125
    %v233 = vmul.f32 %v115, 0.03125
    %v234 = vmul.f32 %v118, 0.03125
    %v235 = vmul.f32 %v121, 0.03125
    %v236 = vmul.f32 %v124, 0.03125
    %v237 = vmul.f32 %v127, 0.03125
    %v238 = vmul.f32 %v130, 0.03125
    %v239 = vmul.f32 %v133, 0.03125
    %v240 = vmul.f32 %v136, 0.03125
    %v241 = vmul.f32 %v139, 0.03125
    %v242 = vmul.f32 %v142, 0.03125
    %v243 = vmul.f32 %v145, 0.03125
    %v244 = vmul.f32 %v181, 0.03125
    %v245 = vmul.f32 %v184, 0.03125
    %v246 = vmul.f32 %v187, 0.03125
    %v247 = vmul.f32 %v190, 0.03125
    %v248 = vmul.f32 %v193, 0.03125
    %v249 = vmul.f32 %v196, 0.03125
    %v250 = vmul.f32 %v199, 0.03125
    %v251 = vmul.f32 %v202, 0.03125
    %v252 = vmul.f32 %v205, 0.03125
    %v253 = vmul.f32 %v208, 0.03125
    %v254 = vmul.f32 %v211, 0.03125
    %v255 = vmul.f32 %v214, 0.03125
    %v256 = vmul.f32 %v217, 0.03125
    %v257 = vmul.f32 %v220, 0.03125
    %v258 = vmul.f32 %v223, 0.03125
    %v259 = vmul.f32 %v226, 0.03125
    %v260 = vmul.f32 %v228, %v228
    %v261 = vmul.f32 %v229, %v229
    %v262 = vmul.f32 %v230, %v230
    %v263 = vmul.f32 %v231, %v231
    %v264 = vmul.f32 %v232, %v232
    %v265 = vmul.f32 %v233, %v233
    %v266 = vmul.f32 %v234, %v234
    %v267 = vmul.f32 %v235, %v235
    %v268 = vmul.f32 %v236, %v236
    %v269 = vmul.f32 %v237, %v237
    %v270 = vmul.f32 %v238, %v238
    %v271 = vmul.f32 %v239, %v239
    %v272 = vmul.f32 %v240, %v240
    %v273 = vmul.f32 %v241, %v241
    %v274 = vmul.f32 %v242, %v242
    %v275 = vmul.f32 %v243, %v243
    %v276 = vsub.f32 %v244, %v260
    %v277 = vsub.f32 %v245, %v261
    %v278 = vsub.f32 %v246, %v262
    %v279 = vsub.f32 %v247, %v263
    %v280 = vsub.f32 %v248, %v264
    %v281 = vsub.f32 %v249, %v265
    %v282 = vsub.f32 %v250, %v266
    %v283 = vsub.f32 %v251, %v267
    %v284 = vsub.f32 %v252, %v268
    %v285 = vsub.f32 %v253, %v269
    %v286 = vsub.f32 %v254, %v270
    %v287 = vsub.f32 %v255, %v271
    %v288 = vsub.f32 %v256, %v272
    %v289 = vsub.f32 %v257, %v273
    %v290 = vsub.f32 %v258, %v274
    %v291 = vsub.f32 %v259, %v275
    %v292 = vmax.f32 %v276, 0.0
    %v293 = vmax.f32 %v277, 0.0
    %v294 = vmax.f32 %v278, 0.0
    %v295 = vmax.f32 %v279, 0.0
    %v296 = vmax.f32 %v280, 0.0
    %v297 = vmax.f32 %v281, 0.0
    %v298 = vmax.f32 %v282, 0.0
    %v299 = vmax.f32 %v283, 0.0
    %v300 = vmax.f32 %v284, 0.0
    %v301 = vmax.f32 %v285, 0.0
    %v302 = vmax.f32 %v286, 0.0
    %v303 = vmax.f32 %v287, 0.0
    %v304 = vmax.f32 %v288, 0.0
    %v305 = vmax.f32 %v289, 0.0
    %v306 = vmax.f32 %v290, 0.0
    %v307 = vmax.f32 %v291, 0.0
    %v308 = vadd.f32 %v292, 1e-05
    %v309 = vadd.f32 %v293, 1e-05
    %v310 = vadd.f32 %v294, 1e-05
    %v311 = vadd.f32 %v295, 1e-05
    %v312 = vadd.f32 %v296, 1e-05
    %v313 = vadd.f32 %v297, 1e-05
    %v314 = vadd.f32 %v298, 1e-05
    %v315 = vadd.f32 %v299, 1e-05
    %v316 = vadd.f32 %v300, 1e-05
    %v317 = vadd.f32 %v301, 1e-05
    %v318 = vadd.f32 %v302, 1e-05
    %v319 = vadd.f32 %v303, 1e-05
    %v320 = vadd.f32 %v304, 1e-05
    %v321 = vadd.f32 %v305, 1e-05
    %v322 = vadd.f32 %v306, 1e-05
    %v323 = vadd.f32 %v307, 1e-05
    %v324 = vrsqrt.pop %v308
    %v325 = vmul.f32 %v324, %v308
    %v326 = vmul.f32 %v325, %v324
    %v327 = vmul.f32 0.5, %v326
    %v328 = vsub.f32 1.5, %v327
    %v329 = vmul.f32 %v324, %v328
    %vm330 = vweird.f32 %v308
    %vm331 = vweird.f32 %v324
    %vm332 = vmor %vm330, %vm331
    %v333 = vsel %vm332, %v324, %v329
    %v334 = vrsqrt.pop %v309
    %v335 = vmul.f32 %v334, %v309
    %v336 = vmul.f32 %v335, %v334
    %v337 = vmul.f32 0.5, %v336
    %v338 = vsub.f32 1.5, %v337
    %v339 = vmul.f32 %v334, %v338
    %vm340 = vweird.f32 %v309
    %vm341 = vweird.f32 %v334
    %vm342 = vmor %vm340, %vm341
    %v343 = vsel %vm342, %v334, %v339
    %v344 = vrsqrt.pop %v310
    %v345 = vmul.f32 %v344, %v310
    %v346 = vmul.f32 %v345, %v344
    %v347 = vmul.f32 0.5, %v346
    %v348 = vsub.f32 1.5, %v347
    %v349 = vmul.f32 %v344, %v348
    %vm350 = vweird.f32 %v310
    %vm351 = vweird.f32 %v344
    %vm352 = vmor %vm350, %vm351
    %v353 = vsel %vm352, %v344, %v349
    %v354 = vrsqrt.pop %v311
    %v355 = vmul.f32 %v354, %v311
    %v356 = vmul.f32 %v355, %v354
    %v357 = vmul.f32 0.5, %v356
    %v358 = vsub.f32 1.5, %v357
    %v359 = vmul.f32 %v354, %v358
    %vm360 = vweird.f32 %v311
    %vm361 = vweird.f32 %v354
    %vm362 = vmor %vm360, %vm361
    %v363 = vsel %vm362, %v354, %v359
    %v364 = vrsqrt.pop %v312
    %v365 = vmul.f32 %v364, %v312
    %v366 = vmul.f32 %v365, %v364
    %v367 = vmul.f32 0.5, %v366
    %v368 = vsub.f32 1.5, %v367
    %v369 = vmul.f32 %v364, %v368
    %vm370 = vweird.f32 %v312
    %vm371 = vweird.f32 %v364
    %vm372 = vmor %vm370, %vm371
    %v373 = vsel %vm372, %v364, %v369
    %v374 = vrsqrt.pop %v313
    %v375 = vmul.f32 %v374, %v313
    %v376 = vmul.f32 %v375, %v374
    %v377 = vmul.f32 0.5, %v376
    %v378 = vsub.f32 1.5, %v377
    %v379 = vmul.f32 %v374, %v378
    %vm380 = vweird.f32 %v313
    %vm381 = vweird.f32 %v374
    %vm382 = vmor %vm380, %vm381
    %v383 = vsel %vm382, %v374, %v379
    %v384 = vrsqrt.pop %v314
    %v385 = vmul.f32 %v384, %v314
    %v386 = vmul.f32 %v385, %v384
    %v387 = vmul.f32 0.5, %v386
    %v388 = vsub.f32 1.5, %v387
    %v389 = vmul.f32 %v384, %v388
    %vm390 = vweird.f32 %v314
    %vm391 = vweird.f32 %v384
    %vm392 = vmor %vm390, %vm391
    %v393 = vsel %vm392, %v384, %v389
    %v394 = vrsqrt.pop %v315
    %v395 = vmul.f32 %v394, %v315
    %v396 = vmul.f32 %v395, %v394
    %v397 = vmul.f32 0.5, %v396
    %v398 = vsub.f32 1.5, %v397
    %v399 = vmul.f32 %v394, %v398
    %vm400 = vweird.f32 %v315
    %vm401 = vweird.f32 %v394
    %vm402 = vmor %vm400, %vm401
    %v403 = vsel %vm402, %v394, %v399
    %v404 = vrsqrt.pop %v316
    %v405 = vmul.f32 %v404, %v316
    %v406 = vmul.f32 %v405, %v404
    %v407 = vmul.f32 0.5, %v406
    %v408 = vsub.f32 1.5, %v407
    %v409 = vmul.f32 %v404, %v408
    %vm410 = vweird.f32 %v316
    %vm411 = vweird.f32 %v404
    %vm412 = vmor %vm410, %vm411
    %v413 = vsel %vm412, %v404, %v409
    %v414 = vrsqrt.pop %v317
    %v415 = vmul.f32 %v414, %v317
    %v416 = vmul.f32 %v415, %v414
    %v417 = vmul.f32 0.5, %v416
    %v418 = vsub.f32 1.5, %v417
    %v419 = vmul.f32 %v414, %v418
    %vm420 = vweird.f32 %v317
    %vm421 = vweird.f32 %v414
    %vm422 = vmor %vm420, %vm421
    %v423 = vsel %vm422, %v414, %v419
    %v424 = vrsqrt.pop %v318
    %v425 = vmul.f32 %v424, %v318
    %v426 = vmul.f32 %v425, %v424
    %v427 = vmul.f32 0.5, %v426
    %v428 = vsub.f32 1.5, %v427
    %v429 = vmul.f32 %v424, %v428
    %vm430 = vweird.f32 %v318
    %vm431 = vweird.f32 %v424
    %vm432 = vmor %vm430, %vm431
    %v433 = vsel %vm432, %v424, %v429
    %v434 = vrsqrt.pop %v319
    %v435 = vmul.f32 %v434, %v319
    %v436 = vmul.f32 %v435, %v434
    %v437 = vmul.f32 0.5, %v436
    %v438 = vsub.f32 1.5, %v437
    %v439 = vmul.f32 %v434, %v438
    %vm440 = vweird.f32 %v319
    %vm441 = vweird.f32 %v434
    %vm442 = vmor %vm440, %vm441
    %v443 = vsel %vm442, %v434, %v439
    %v444 = vrsqrt.pop %v320
    %v445 = vmul.f32 %v444, %v320
    %v446 = vmul.f32 %v445, %v444
    %v447 = vmul.f32 0.5, %v446
    %v448 = vsub.f32 1.5, %v447
    %v449 = vmul.f32 %v444, %v448
    %vm450 = vweird.f32 %v320
    %vm451 = vweird.f32 %v444
    %vm452 = vmor %vm450, %vm451
    %v453 = vsel %vm452, %v444, %v449
    %v454 = vrsqrt.pop %v321
    %v455 = vmul.f32 %v454, %v321
    %v456 = vmul.f32 %v455, %v454
    %v457 = vmul.f32 0.5, %v456
    %v458 = vsub.f32 1.5, %v457
    %v459 = vmul.f32 %v454, %v458
    %vm460 = vweird.f32 %v321
    %vm461 = vweird.f32 %v454
    %vm462 = vmor %vm460, %vm461
    %v463 = vsel %vm462, %v454, %v459
    %v464 = vrsqrt.pop %v322
    %v465 = vmul.f32 %v464, %v322
    %v466 = vmul.f32 %v465, %v464
    %v467 = vmul.f32 0.5, %v466
    %v468 = vsub.f32 1.5, %v467
    %v469 = vmul.f32 %v464, %v468
    %vm470 = vweird.f32 %v322
    %vm471 = vweird.f32 %v464
    %vm472 = vmor %vm470, %vm471
    %v473 = vsel %vm472, %v464, %v469
    %v474 = vrsqrt.pop %v323
    %v475 = vmul.f32 %v474, %v323
    %v476 = vmul.f32 %v475, %v474
    %v477 = vmul.f32 0.5, %v476
    %v478 = vsub.f32 1.5, %v477
    %v479 = vmul.f32 %v474, %v478
    %vm480 = vweird.f32 %v323
    %vm481 = vweird.f32 %v474
    %vm482 = vmor %vm480, %vm481
    %v483 = vsel %vm482, %v474, %v479
    %v484 = vld [vmem:[%s2] sm:$0x1]
    %v485 = vld [vmem:[%s3] sm:$0x1]
    %v486 = vsub.f32 %v50, %v228
    %v487 = vsub.f32 %v51, %v229
    %v488 = vsub.f32 %v52, %v230
    %v489 = vsub.f32 %v53, %v231
    %v490 = vsub.f32 %v54, %v232
    %v491 = vsub.f32 %v55, %v233
    %v492 = vsub.f32 %v56, %v234
    %v493 = vsub.f32 %v57, %v235
    %v494 = vsub.f32 %v58, %v236
    %v495 = vsub.f32 %v59, %v237
    %v496 = vsub.f32 %v60, %v238
    %v497 = vsub.f32 %v61, %v239
    %v498 = vsub.f32 %v62, %v240
    %v499 = vsub.f32 %v63, %v241
    %v500 = vsub.f32 %v64, %v242
    %v501 = vsub.f32 %v65, %v243
    %v502 = vmul.f32 %v486, %v333
    %v503 = vmul.f32 %v487, %v343
    %v504 = vmul.f32 %v488, %v353
    %v505 = vmul.f32 %v489, %v363
    %v506 = vmul.f32 %v490, %v373
    %v507 = vmul.f32 %v491, %v383
    %v508 = vmul.f32 %v492, %v393
    %v509 = vmul.f32 %v493, %v403
    %v510 = vmul.f32 %v494, %v413
    %v511 = vmul.f32 %v495, %v423
    %v512 = vmul.f32 %v496, %v433
    %v513 = vmul.f32 %v497, %v443
    %v514 = vmul.f32 %v498, %v453
    %v515 = vmul.f32 %v499, %v463
    %v516 = vmul.f32 %v500, %v473
    %v517 = vmul.f32 %v501, %v483
    %v519 = vperm.slane %v484, 0
    %v521 = vmul.f32 %v502, %v519
    %v522 = vmul.f32 %v503, %v519
    %v523 = vmul.f32 %v504, %v519
    %v524 = vmul.f32 %v505, %v519
    %v525 = vmul.f32 %v506, %v519
    %v526 = vmul.f32 %v507, %v519
    %v527 = vmul.f32 %v508, %v519
    %v528 = vmul.f32 %v509, %v519
    %v529 = vmul.f32 %v510, %v519
    %v530 = vmul.f32 %v511, %v519
    %v531 = vmul.f32 %v512, %v519
    %v532 = vmul.f32 %v513, %v519
    %v533 = vmul.f32 %v514, %v519
    %v534 = vmul.f32 %v515, %v519
    %v535 = vmul.f32 %v516, %v519
    %v536 = vmul.f32 %v517, %v519
    %v538 = vperm.slane %v485, 0
    %v540 = vadd.f32 %v521, %v538
    %v541 = vadd.f32 %v522, %v538
    %v542 = vadd.f32 %v523, %v538
    %v543 = vadd.f32 %v524, %v538
    %v544 = vadd.f32 %v525, %v538
    %v545 = vadd.f32 %v526, %v538
    %v546 = vadd.f32 %v527, %v538
    %v547 = vadd.f32 %v528, %v538
    %v548 = vadd.f32 %v529, %v538
    %v549 = vadd.f32 %v530, %v538
    %v550 = vadd.f32 %v531, %v538
    %v551 = vadd.f32 %v532, %v538
    %v552 = vadd.f32 %v533, %v538
    %v553 = vadd.f32 %v534, %v538
    %v554 = vadd.f32 %v535, %v538
    %v555 = vadd.f32 %v536, %v538
    %556 = vst [vmem:[#allocation7] sm:$0xff] %v540
    %557 = vst [vmem:[#allocation7 + $0x8] sm:$0xff] %v541
    %558 = vst [vmem:[#allocation7 + $0x10] sm:$0xff] %v542
    %559 = vst [vmem:[#allocation7 + $0x18] sm:$0xff] %v543
    %560 = vst [vmem:[#allocation7 + $0x20] sm:$0xff] %v544
    %561 = vst [vmem:[#allocation7 + $0x28] sm:$0xff] %v545
    %562 = vst [vmem:[#allocation7 + $0x30] sm:$0xff] %v546
    %563 = vst [vmem:[#allocation7 + $0x38] sm:$0xff] %v547
    %564 = vst [vmem:[#allocation7 + $0x40] sm:$0xff] %v548
    %565 = vst [vmem:[#allocation7 + $0x48] sm:$0xff] %v549
    %566 = vst [vmem:[#allocation7 + $0x50] sm:$0xff] %v550
    %567 = vst [vmem:[#allocation7 + $0x58] sm:$0xff] %v551
    %568 = vst [vmem:[#allocation7 + $0x60] sm:$0xff] %v552
    %569 = vst [vmem:[#allocation7 + $0x68] sm:$0xff] %v553
    %570 = vst [vmem:[#allocation7 + $0x70] sm:$0xff] %v554
    %571 = vst [vmem:[#allocation7 + $0x78] sm:$0xff] %v555
    // Predicated region
    $region26: #{tpu_custom_call.1} parent=1 // pred_check
      _
    $region27: #{tpu_custom_call.1} parent=1 // pred_check_branch
      %573 = sbr.rel (0) target = $region29
    $region28: #{tpu_custom_call.1} parent=1 // pred_region
      %575 = vsyncadd [#allocation4], 0
      %s576 = sshll.u32 [#allocation7], 4
      %s577 = int_to_ptr.vmem [resolvable:$true] %s576
      %s578 = sshll.u32 %s4, 4
      %s579 = int_to_ptr.hbm [resolvable:$true] %s578
      %584 = dma.vmem_to_hbm [thread:$0]  %s577, 2048, %s579, [#allocation4], 128, 128, 8
    $region29: #{tpu_custom_call.1} parent=1 // pred_fallthru
      _
    // Predicated region
    $region30: #{tpu_custom_call.1} parent=1 // pred_check
      _
    $region31: #{tpu_custom_call.1} parent=1 // pred_check_branch
      %586 = sbr.rel (0) target = $region33
    $region32: #{tpu_custom_call.1} parent=1 // pred_region
      %588 = dma.done [#allocation4], 2048
    $region33: #{tpu_custom_call.1} parent=1 // pred_fallthru
      _
    %589 = vsyncpa [#allocation3], 1
    %590 = vsyncpa [#allocation6], 1
    %591 = vsyncpa [#allocation4], 1

</llo_original>
